<compile_context>
chip_gen: v5e
topology: v5e:2x2
jax: 0.10.0
libtpu: 0.0.40
codegen_flags: <defaults>
</compile_context>

<pallas_src>
import functools

import jax
import jax.numpy as jnp
from jax.experimental import pallas as pl
from jax.experimental.pallas import tpu as pltpu

BETA = 30.0
VALUE_SCALE = 500.0

_MIN_SPLIT_COLS = 2048          # below this, splitting the grid is pure overhead
_VMEM_LIMIT_BYTES = 48 << 20    # < v7x 64 MiB physical, < v5e/v6e 128 MiB


def _cdiv(a, b):
    return -(-a // b)


def _round_up(a, m):
    return _cdiv(a, m) * m


def _dlgn_vt_kernel(n1, xt_ref, wb_ref, v_ref, out_ref):
    """One batch tile (all arrays in the batch-on-lanes domain).

    xt_ref : (D, TM)      x^T tile, lane-dense, pipelined
    wb_ref : (n1+n2, D)   beta * [W1; W2], VMEM-resident
    v_ref  : (n1, n2)     value tensor, VMEM-resident
    out_ref: (1, TM)      lane-dense per-row outputs
    """
    # z^T[n, b] = sum_d (beta*W)[n, d] * x[b, d]  -> (n1+n2, TM).
    # Natural MXU orientation for both operands (no relayout of the x tile).
    z_t = jnp.dot(wb_ref[...], xt_ref[...], preferred_element_type=jnp.float32)

    # One fused sigmoid launch over the whole gate tile (EUP, lane-dense).
    g_t = jax.nn.sigmoid(z_t)

    g1_t = g_t[:n1, :]        # (n1, TM) sublane-aligned static slice
    g2_t = g_t[n1:, :]        # (n2, TM)

    # t^T[j, b] = sum_k V[j, k] * g2[b, k]  -> (n1, TM); natural MXU layouts.
    t_t = jnp.dot(v_ref[...], g2_t, preferred_element_type=jnp.float32)

    # out[b] = sum_j g1[b, j] * t[b, j]: VPU multiply + sublane reduce -> the
    # result is already a lane-dense (1, TM) row (unmasked stores).
    out_ref[...] = jnp.sum(g1_t * t_t, axis=0, keepdims=True)


def prepare_dlgn_vt_params(w1, w2, beta=BETA, dtype=jnp.float32):
    """One-time parameter transform (model setup, NOT per forward call):
    fuse the two gating weight matrices and fold beta in."""
    wb = beta * jnp.concatenate([w1, w2], axis=0).astype(jnp.float32)
    return wb.astype(dtype)


def _derive_block_cols(d, n1, n2, vmem_budget_bytes):
    """Batch-column tile size from a VMEM budget (f32 accounting, lane-dense):
       x tile, double buffered           : 2 * d * 4      bytes / column
       out row (1->8 sublane pad), x2    : 2 * 8 * 4
       intermediates z, g (n1+n2 rows) +
       g1-slice, t, g1*t (n1 rows each)  : (2*(n1+n2) + 4*n1) * 4
    Resident weights (~tens of KiB) are negligible."""
    h = n1 + n2
    per_col = (2 * d + 2 * 8 + 2 * h + 4 * n1) * 4
    return max(128, (vmem_budget_bytes // per_col) // 128 * 128)


def _choose_tiling(n_cols, budget_cols):
    """Pick (tile_cols, num_blocks) for the batch/lane axis."""
    if n_cols <= min(_MIN_SPLIT_COLS, budget_cols):
        return n_cols, 1                        # single block == full array
    budget_cols = max(128, (budget_cols // 128) * 128)
    nb = max(2, _cdiv(n_cols, budget_cols))
    if nb % 2:                                  # even count: v7x has 2 TCs
        nb += 1
    tm = _round_up(_cdiv(n_cols, nb), 128)
    nb = _cdiv(n_cols, tm)
    return tm, nb


def dlgn_vt_forward_xt(xt, w_beta, v, *, block_cols=None,
                       vmem_budget_bytes=24 << 20):
    """Preferred entry point: xt is x TRANSPOSED, shape (D, B) (lane-dense).

    w_beta: (n1+n2, D) from prepare_dlgn_vt_params; v: (n1, n2).
    Returns the (B,) float32 DLGN_VT forward output.
    """
    D, B = xt.shape
    n1, n2 = v.shape
    assert w_beta.shape == (n1 + n2, D)

    if block_cols is None:
        block_cols = _derive_block_cols(D, n1, n2, vmem_budget_bytes)
    tm, nb = _choose_tiling(B, block_cols)

    out2d = pl.pallas_call(
        functools.partial(_dlgn_vt_kernel, n1),
        out_shape=jax.ShapeDtypeStruct((1, nb * tm), jnp.float32),
        grid=(nb,),
        in_specs=[
            pl.BlockSpec((D, tm), lambda i: (0, i)),         # x^T tile (pipelined)
            pl.BlockSpec((n1 + n2, D), lambda i: (0, 0)),    # fused gate weights
            pl.BlockSpec((n1, n2), lambda i: (0, 0)),        # value tensor
        ],
        out_specs=pl.BlockSpec((1, tm), lambda i: (0, i)),   # lane-dense output row
        compiler_params=pltpu.CompilerParams(
            dimension_semantics=("parallel",),               # megacore / v7x 2 TCs
            vmem_limit_bytes=_VMEM_LIMIT_BYTES),
    )(xt, w_beta, v.astype(jnp.float32))

    return out2d.reshape(-1)[:B]


def dlgn_vt_forward(x, w_beta, v, **kwargs):
    """Convenience entry point: x in the usual (B, D) layout.

    NOTE: transposes x outside the kernel (one extra HBM round trip of x).
    If the producer can emit x feature-major, call dlgn_vt_forward_xt directly.
    """
    return dlgn_vt_forward_xt(jnp.transpose(x), w_beta, v, **kwargs)


def dlgn_vt_reference(x, w1, w2, v, beta=BETA):
    """Pure-JAX reference mirroring the PyTorch npk_forward + weighted sum."""
    g1 = jax.nn.sigmoid(beta * (x @ w1.T))                 # (B, n1)
    g2 = jax.nn.sigmoid(beta * (x @ w2.T))                 # (B, n2)
    cp = g1[:, :, None] * g2[:, None, :]                   # (B, n1, n2)
    return jnp.sum(cp * v[None, :, :], axis=(1, 2))        # (B,)


if __name__ == "__main__":
    # Small shapes consistent with the module: input_dim=16, num_hidden_nodes=[16, 16]
    B, D, N1, N2 = 8, 16, 16, 16

    key = jax.random.PRNGKey(0)
    kx, kw1, kw2, kv = jax.random.split(key, 4)

    x = jax.random.normal(kx, (B, D), dtype=jnp.float32)
    # nn.Linear(input_dim, n_i, bias=False).weight -> shape (n_i, input_dim)
    w1 = jax.random.normal(kw1, (N1, D), dtype=jnp.float32) * 0.1
    w2 = jax.random.normal(kw2, (N2, D), dtype=jnp.float32) * 0.1
    # value_layers = randn([1, n1, n2]) / value_scale, leading 1 squeezed
    v = jax.random.normal(kv, (N1, N2), dtype=jnp.float32) / VALUE_SCALE

    # One-time parameter preparation (beta folding + gate-weight fusion).
    w_beta = prepare_dlgn_vt_params(w1, w2)

    out = dlgn_vt_forward(x, w_beta, v)
    jax.block_until_ready(out)
    ref = dlgn_vt_reference(x, w1, w2, v)
    assert out.shape == (B,)
    assert jnp.allclose(out, ref, atol=1e-5, rtol=1e-5), (out, ref)

    # Multi-block path with a partial edge block (no wrapper pad copy) and an
    # even block count; small block_cols override just to exercise the grid.
    B2 = 1000
    x2 = jax.random.normal(jax.random.PRNGKey(1), (B2, D), dtype=jnp.float32)
    out2 = dlgn_vt_forward(x2, w_beta, v, block_cols=256)
    jax.block_until_ready(out2)
    ref2 = dlgn_vt_reference(x2, w1, w2, v)
    assert out2.shape == (B2,)
    assert jnp.allclose(out2, ref2, atol=1e-5, rtol=1e-5)

    # Mixed-precision path: bf16 x / gate weights (halves x HBM traffic),
    # f32 MXU accumulation and f32 gates/reduction.
    w_beta_bf16 = prepare_dlgn_vt_params(w1, w2, dtype=jnp.bfloat16)
    out_bf16 = dlgn_vt_forward(x.astype(jnp.bfloat16), w_beta_bf16, v)
    jax.block_until_ready(out_bf16)
    assert out_bf16.shape == (B,)
    assert bool(jnp.all(jnp.isfinite(out_bf16)))
    assert float(jnp.max(jnp.abs(out_bf16 - ref))) < 5e-2

    print("KERNEL_OK")
</pallas_src>

<mosaic_0001>
module attributes {stable_mosaic.version = 11 : i64} {
  func.func @_dlgn_vt_kernel(%arg0: i32, %arg1: memref<16x8xf32, #tpu.memory_space<vmem>>, %arg2: memref<32x16xf32, #tpu.memory_space<vmem>>, %arg3: memref<16x16xf32, #tpu.memory_space<vmem>>, %arg4: memref<1x8xf32, #tpu.memory_space<vmem>>) attributes {dimension_semantics = [#tpu.dimension_semantics<parallel>], iteration_bounds = array<i64: 1>, scalar_prefetch = 0 : i64, scratch_operands = 0 : i64, tpu.core_type = #tpu.core_type<tc>, window_params = [{transform_indices = @transform_0, window_bounds = array<i64: 16, 8>}, {pipeline_mode = #tpu.pipeline_mode<synchronous>, transform_indices = @transform_1, window_bounds = array<i64: 32, 16>}, {pipeline_mode = #tpu.pipeline_mode<synchronous>, transform_indices = @transform_2, window_bounds = array<i64: 16, 16>}, {transform_indices = @transform_3, window_bounds = array<i64: 1, 8>}]} {
    %c0 = arith.constant 0 : index
    %c0_0 = arith.constant 0 : index
    %0 = vector.load %arg2[%c0, %c0_0] : memref<32x16xf32, #tpu.memory_space<vmem>>, vector<32x16xf32>
    %c0_1 = arith.constant 0 : index
    %c0_2 = arith.constant 0 : index
    %1 = vector.load %arg1[%c0_1, %c0_2] : memref<16x8xf32, #tpu.memory_space<vmem>>, vector<16x8xf32>
    %cst = arith.constant dense<0.000000e+00> : vector<32x8xf32>
    %2 = tpu.matmul %0, %1, %cst {dimension_numbers = #tpu.dot_dimension_numbers<[1], [0], [0], [1], [0, 0, 1, 1], [], []>} : vector<32x16xf32>, vector<16x8xf32>, vector<32x8xf32> -> vector<32x8xf32>
    %3 = arith.negf %2 : vector<32x8xf32>
    %4 = math.exp %3 : vector<32x8xf32>
    %cst_3 = arith.constant 1.000000e+00 : f32
    %5 = vector.broadcast %cst_3 : f32 to vector<32x8xf32>
    %6 = arith.addf %5, %4 : vector<32x8xf32>
    %7 = arith.divf %5, %6 : vector<32x8xf32>
    %8 = vector.extract_strided_slice %7 {offsets = [0, 0], sizes = [16, 8], strides = [1, 1]} : vector<32x8xf32> to vector<16x8xf32>
    %9 = vector.extract_strided_slice %7 {offsets = [16, 0], sizes = [16, 8], strides = [1, 1]} : vector<32x8xf32> to vector<16x8xf32>
    %c0_4 = arith.constant 0 : index
    %c0_5 = arith.constant 0 : index
    %10 = vector.load %arg3[%c0_4, %c0_5] : memref<16x16xf32, #tpu.memory_space<vmem>>, vector<16x16xf32>
    %cst_6 = arith.constant dense<0.000000e+00> : vector<16x8xf32>
    %11 = tpu.matmul %10, %9, %cst_6 {dimension_numbers = #tpu.dot_dimension_numbers<[1], [0], [0], [1], [0, 0, 1, 1], [], []>} : vector<16x16xf32>, vector<16x8xf32>, vector<16x8xf32> -> vector<16x8xf32>
    %12 = arith.mulf %8, %11 : vector<16x8xf32>
    %cst_7 = arith.constant dense<0.000000e+00> : vector<8xf32>
    %13 = vector.multi_reduction <add>, %12, %cst_7 [0] : vector<16x8xf32> to vector<8xf32>
    %14 = vector.shape_cast %13 : vector<8xf32> to vector<1x8xf32>
    %c0_8 = arith.constant 0 : index
    %c0_9 = arith.constant 0 : index
    %15 = vector.load %arg4[%c0_8, %c0_9] : memref<1x8xf32, #tpu.memory_space<vmem>>, vector<1x8xf32>
    tpu.vector_store %arg4[%c0_8, %c0_9], %14 {strides = array<i32>} : memref<1x8xf32, #tpu.memory_space<vmem>>, vector<1x8xf32>,
    return
  }
  func.func @transform_0(%arg0: i32) -> (i32, i32) {
    %c0_i32 = arith.constant 0 : i32
    %c0_i32_0 = arith.constant 0 : i32
    return %c0_i32, %arg0 : i32, i32
  }
  func.func @transform_1(%arg0: i32) -> (i32, i32) {
    %c0_i32 = arith.constant 0 : i32
    %c0_i32_0 = arith.constant 0 : i32
    %c0_i32_1 = arith.constant 0 : i32
    return %c0_i32, %c0_i32_0 : i32, i32
  }
  func.func @transform_2(%arg0: i32) -> (i32, i32) {
    %c0_i32 = arith.constant 0 : i32
    %c0_i32_0 = arith.constant 0 : i32
    %c0_i32_1 = arith.constant 0 : i32
    return %c0_i32, %c0_i32_0 : i32, i32
  }
  func.func @transform_3(%arg0: i32) -> (i32, i32) {
    %c0_i32 = arith.constant 0 : i32
    %c0_i32_0 = arith.constant 0 : i32
    return %c0_i32, %arg0 : i32, i32
  }
}

</mosaic_0001>

<llo_original>
// kernel: tpu_custom_call.1
$region0: #{tpu_custom_call.1}
  #allocation0 [shape = 'u32[]', space=smem, size = 0x4, offset = 0x4, fixed_abs, tag = 'smem constant byte address 0x4 - core index']
  #allocation1 [shape = 'u32[72,128]{1,0:T(1,128)}', space=vmem, size = 0x9000, scoped, tag = 'internal scratch']
  %s0 = inlined_call_operand.vmem [shape: f32[16,8], index: 0, kind: input, shape index: {}]
  %s1 = inlined_call_operand.vmem [shape: f32[32,16], index: 1, kind: input, shape index: {}]
  %s2 = inlined_call_operand.vmem [shape: f32[16,16], index: 2, kind: input, shape index: {}]
  %s3 = inlined_call_operand.hbm [shape: f32[1,8], index: 3, kind: output, shape index: {}]
  %s4 = sld [smem:[#allocation0]]
  $region22: #{tpu_custom_call.1} parent=0
    _
  %s6 = ssub.s32 1, %s4
  %s7 = scalar_select 0, %s6, %s4
  $region1: #{tpu_custom_call.1} parent=0
    #allocation2 [shape = 'u8[512]{0}', space=vmem, size = 0x400, scoped, tag = 'output window, operand 0, single buffered']
    #allocation3 [shape = 's32[1]{0}', space=sflag, size = 0x4, scoped, tag = 'scoped memory for tpu_custom_call.1']
    %8 = vsyncpa [#allocation3], 0
    // Predicated region
    $region2: #{tpu_custom_call.1} parent=1 // pred_check
      _
    $region3: #{tpu_custom_call.1} parent=1 // pred_check_branch
      %10 = sbr.rel (0) target = $region5
    $region4: #{tpu_custom_call.1} parent=1 // pred_region
      _
    $region5: #{tpu_custom_call.1} parent=1 // pred_fallthru
      _
    // Predicated region
    $region6: #{tpu_custom_call.1} parent=1 // pred_check
      _
    $region7: #{tpu_custom_call.1} parent=1 // pred_check_branch
      %12 = sbr.rel (0) target = $region9
    $region8: #{tpu_custom_call.1} parent=1 // pred_region
      _
    $region9: #{tpu_custom_call.1} parent=1 // pred_fallthru
      _
    // Predicated region
    $region10: #{tpu_custom_call.1} parent=1 // pred_check
      _
    $region11: #{tpu_custom_call.1} parent=1 // pred_check_branch
      %14 = sbr.rel (0) target = $region13
    $region12: #{tpu_custom_call.1} parent=1 // pred_region
      _
    $region13: #{tpu_custom_call.1} parent=1 // pred_fallthru
      _
    %v15 = vld [vmem:[%s1] sm:$0xff]
    %v16 = vld [vmem:[%s1 + $0x8] sm:$0xff]
    %v17 = vld [vmem:[%s1 + $0x10] sm:$0xff]
    %v18 = vld [vmem:[%s1 + $0x18] sm:$0xff]
    %v19 = vld [vmem:[%s0] sm:$0xff]
    %v20 = vld [vmem:[%s0 + $0x8] sm:$0xff]
    %vm21 = vcmask 130048
    %v23 = vsel %vm21, %v15, 0
    %v26 = vsel %vm21, %v16, 0
    %v29 = vsel %vm21, %v17, 0
    %v32 = vsel %vm21, %v18, 0
    %34 = vmatpush.msra.mxu0 0.0
    %35 = vmatpush.msra.mxu0 0.0
    %36 = vmatpush.msra.mxu0 0.0
    %37 = vmatpush.msra.mxu0 0.0
    %38 = vmatpush.msra.mxu0 0.0
    %39 = vmatpush.msra.mxu0 0.0
    %40 = vmatpush.msra.mxu0 0.0
    %41 = vmatpush.msra.mxu0 0.0
    %42 = vmatpush.msra.mxu0 0.0
    %43 = vmatpush.msra.mxu0 0.0
    %44 = vmatpush.msra.mxu0 0.0
    %45 = vmatpush.msra.mxu0 0.0
    %46 = vmatpush.msra.mxu0 0.0
    %47 = vmatpush.msra.mxu0 0.0
    %48 = vmatpush.msra.mxu0 %v20
    %49 = vmatpush.msra.mxu0 %v19
    %50 = vmatmul.f32.gmra.mxu0 %v23
    %v51 = vpop.f32.mrf.mxu0
    %v52 = vadd.f32 0.0, %v51
    %53 = vmatmul.f32.gmra.mxu0 %v26
    %v54 = vpop.f32.mrf.mxu0
    %v55 = vadd.f32 0.0, %v54
    %56 = vmatmul.f32.gmra.mxu0 %v29
    %v57 = vpop.f32.mrf.mxu0
    %v58 = vadd.f32 0.0, %v57
    %59 = vmatmul.f32.gmra.mxu0 %v32
    %v60 = vpop.f32.mrf.mxu0
    %v61 = vadd.f32 0.0, %v60
    %62 = vdwg.mxu0
    %v63 = vxor.u32 %v52, 2147483648
    %v64 = vxor.u32 %v55, 2147483648
    %v65 = vxor.u32 %v58, 2147483648
    %v66 = vxor.u32 %v61, 2147483648
    %v67 = vmul.f32 %v63, 1.442695
    %v68 = vpow.pop %v67
    %v69 = vmul.f32 %v64, 1.442695
    %v70 = vpow.pop %v69
    %v71 = vmul.f32 %v65, 1.442695
    %v72 = vpow.pop %v71
    %v73 = vmul.f32 %v66, 1.442695
    %v74 = vpow.pop %v73
    %v75 = vadd.f32 %v68, 1.0
    %v76 = vadd.f32 %v70, 1.0
    %v77 = vadd.f32 %v72, 1.0
    %v78 = vadd.f32 %v74, 1.0
    %v79 = vrcp.pop %v75
    %v80 = vmul.f32 %v75, %v79
    %v81 = vsub.f32 1.0, %v80
    %v82 = vmul.f32 %v79, %v81
    %v83 = vadd.f32 %v79, %v82
    %vm84 = vweird.f32 %v75
    %vm85 = vweird.f32 %v79
    %vm86 = vmor %vm84, %vm85
    %v87 = vsel %vm86, %v79, %v83
    %v88 = vand.u32 2147483647, %v75
    %vm89 = vcmp.eq.f32.partialorder %v88, 8.507059e+37
    %v90 = vand.u32 %v75, 2147483648
    %v91 = vor.u32 1.1754944e-38, %v90
    %v92 = vsel %vm89, %v91, %v87
    %v93 = vmul.f32 1.0, %v92
    %v94 = vrcp.pop %v76
    %v95 = vmul.f32 %v76, %v94
    %v96 = vsub.f32 1.0, %v95
    %v97 = vmul.f32 %v94, %v96
    %v98 = vadd.f32 %v94, %v97
    %vm99 = vweird.f32 %v76
    %vm100 = vweird.f32 %v94
    %vm101 = vmor %vm99, %vm100
    %v102 = vsel %vm101, %v94, %v98
    %v103 = vand.u32 2147483647, %v76
    %vm104 = vcmp.eq.f32.partialorder %v103, 8.507059e+37
    %v105 = vand.u32 %v76, 2147483648
    %v106 = vor.u32 1.1754944e-38, %v105
    %v107 = vsel %vm104, %v106, %v102
    %v108 = vmul.f32 1.0, %v107
    %v109 = vrcp.pop %v77
    %v110 = vmul.f32 %v77, %v109
    %v111 = vsub.f32 1.0, %v110
    %v112 = vmul.f32 %v109, %v111
    %v113 = vadd.f32 %v109, %v112
    %vm114 = vweird.f32 %v77
    %vm115 = vweird.f32 %v109
    %vm116 = vmor %vm114, %vm115
    %v117 = vsel %vm116, %v109, %v113
    %v118 = vand.u32 2147483647, %v77
    %vm119 = vcmp.eq.f32.partialorder %v118, 8.507059e+37
    %v120 = vand.u32 %v77, 2147483648
    %v121 = vor.u32 1.1754944e-38, %v120
    %v122 = vsel %vm119, %v121, %v117
    %v123 = vmul.f32 1.0, %v122
    %v124 = vrcp.pop %v78
    %v125 = vmul.f32 %v78, %v124
    %v126 = vsub.f32 1.0, %v125
    %v127 = vmul.f32 %v124, %v126
    %v128 = vadd.f32 %v124, %v127
    %vm129 = vweird.f32 %v78
    %vm130 = vweird.f32 %v124
    %vm131 = vmor %vm129, %vm130
    %v132 = vsel %vm131, %v124, %v128
    %v133 = vand.u32 2147483647, %v78
    %vm134 = vcmp.eq.f32.partialorder %v133, 8.507059e+37
    %v135 = vand.u32 %v78, 2147483648
    %v136 = vor.u32 1.1754944e-38, %v135
    %v137 = vsel %vm134, %v136, %v132
    %v138 = vmul.f32 1.0, %v137
    %v139 = vld [vmem:[%s2] sm:$0xff]
    %v140 = vld [vmem:[%s2 + $0x8] sm:$0xff]
    %v142 = vsel %vm21, %v139, 0
    %v145 = vsel %vm21, %v140, 0
    %147 = vmatpush.msra.mxu0 0.0
    %148 = vmatpush.msra.mxu0 0.0
    %149 = vmatpush.msra.mxu0 0.0
    %150 = vmatpush.msra.mxu0 0.0
    %151 = vmatpush.msra.mxu0 0.0
    %152 = vmatpush.msra.mxu0 0.0
    %153 = vmatpush.msra.mxu0 0.0
    %154 = vmatpush.msra.mxu0 0.0
    %155 = vmatpush.msra.mxu0 0.0
    %156 = vmatpush.msra.mxu0 0.0
    %157 = vmatpush.msra.mxu0 0.0
    %158 = vmatpush.msra.mxu0 0.0
    %159 = vmatpush.msra.mxu0 0.0
    %160 = vmatpush.msra.mxu0 0.0
    %161 = vmatpush.msra.mxu0 %v138
    %162 = vmatpush.msra.mxu0 %v123
    %163 = vmatmul.f32.gmra.mxu0 %v142
    %v164 = vpop.f32.mrf.mxu0
    %v165 = vadd.f32 0.0, %v164
    %166 = vmatmul.f32.gmra.mxu0 %v145
    %v167 = vpop.f32.mrf.mxu0
    %v168 = vadd.f32 0.0, %v167
    %169 = vdwg.mxu0
    %v170 = vmul.f32 %v93, %v165
    %v171 = vmul.f32 %v108, %v168
    %vm172 = vcmask 64512
    %v173 = vsel %vm172, %v170, 0.0
    %v174 = vsel %vm172, %v171, 0.0
    %v175 = vadd.f32 %v173, %v174
    %v176 = vrot.slane %v175, 4
    %v177 = vadd.f32 %v175, %v176
    %v178 = vrot.slane %v177, 2
    %v179 = vadd.f32 %v177, %v178
    %v180 = vrot.slane %v179, 1
    %v181 = vadd.f32 %v179, %v180
    %vm182 = vcmask 57344
    %183 = vst.msk [vmem:[#allocation2] sm:$0x1] %vm182, %v181
    // Predicated region
    $region14: #{tpu_custom_call.1} parent=1 // pred_check
      _
    $region15: #{tpu_custom_call.1} parent=1 // pred_check_branch
      %185 = sbr.rel (0) target = $region17
    $region16: #{tpu_custom_call.1} parent=1 // pred_region
      %187 = vsyncadd [#allocation3], 0
      %s189 = sshll.u32 [#allocation2], 4
      %s190 = int_to_ptr.vmem [resolvable:$true] %s189
      %s191 = sshll.u32 %s3, 4
      %s192 = int_to_ptr.hbm [resolvable:$true] %s191
      %194 = dma.vmem_to_hbm [thread:$0]  %s190, 16, %s192, [#allocation3]
    $region17: #{tpu_custom_call.1} parent=1 // pred_fallthru
      _
    // Predicated region
    $region18: #{tpu_custom_call.1} parent=1 // pred_check
      _
    $region19: #{tpu_custom_call.1} parent=1 // pred_check_branch
      %196 = sbr.rel (0) target = $region21
    $region20: #{tpu_custom_call.1} parent=1 // pred_region
      %198 = dma.done [#allocation3], 16
    $region21: #{tpu_custom_call.1} parent=1 // pred_fallthru
      _
    %199 = vsyncpa [#allocation3], 1

</llo_original>
